<compile_context>
chip_gen: v7x
topology: tpu7x:2x2x1
jax: 0.10.0
libtpu: 0.0.40
codegen_flags: <defaults>
</compile_context>

<pallas_src>
import functools

import jax
import jax.numpy as jnp
from jax.experimental import pallas as pl
from jax.experimental.pallas import tpu as pltpu

EPS = 1e-5  # PyTorch InstanceNorm default eps


def _gate_attention_kernel(up_ref, ori_ref, wup_ref, wori_ref, wpsi_ref, out_ref,
                           *, hw_valid, masked):
    """One grid step: `nb` batch elements, full (padded) HW resident in VMEM.

    up_ref:   (nb, Cup,  HWp)  channels on sublanes, HW on lanes
    ori_ref:  (nb, Cori, HWp)
    wup_ref:  (mid, Cup)       1x1 conv weights (VMEM)
    wori_ref: (mid, Cori)
    wpsi_ref: (mid, 1)
    out_ref:  (nb, Cori, HWp)
    """
    nb, cup, hwp = up_ref.shape
    cori = ori_ref.shape[1]

    w_up = wup_ref[...].astype(jnp.float32)    # (mid, Cup)
    w_ori = wori_ref[...].astype(jnp.float32)  # (mid, Cori)
    w_psi = wpsi_ref[...].astype(jnp.float32)  # (mid, 1)

    inv_hw = jnp.float32(1.0 / hw_valid)
    if masked:
        lane = jax.lax.broadcasted_iota(jnp.int32, (1, hwp), 1)
        mask = (lane < hw_valid).astype(jnp.float32)  # (1, HWp)

    def inorm(x):
        # InstanceNorm(affine=False): per-row stats over the valid HW lanes,
        # biased variance; residual `d` is hoisted and reused.
        xm = x * mask if masked else x
        mu = jnp.sum(xm, axis=-1, keepdims=True) * inv_hw
        d = x - mu
        if masked:
            d = d * mask  # zero padded lanes (also removes them from var)
        var = jnp.sum(d * d, axis=-1, keepdims=True) * inv_hw
        return d * jax.lax.rsqrt(var + EPS)

    # Small (<= 8) fully-unrolled batch loop; every iteration works on
    # full-sublane (mid, HWp) tiles, so there is no low-density work inside.
    for n in range(nb):
        up = up_ref[n].astype(jnp.float32)    # (Cup, HWp)
        ori = ori_ref[n].astype(jnp.float32)  # (Cori, HWp)

        # 1x1 convs over all mid channels at once (VPU broadcast FMAs).
        # Biases are dropped: InstanceNorm cancels a per-channel constant.
        u = up[0:1, :] * w_up[:, 0:1]                       # (mid, HWp)
        for c in range(1, cup):
            u = u + up[c:c + 1, :] * w_up[:, c:c + 1]
        o = ori[0:1, :] * w_ori[:, 0:1]                     # (mid, HWp)
        for c in range(1, cori):
            o = o + ori[c:c + 1, :] * w_ori[:, c:c + 1]

        # InstanceNorm both branches, add, relu.
        s = jnp.maximum(inorm(u) + inorm(o), 0.0)           # (mid, HWp)

        # psi 1x1 conv (mid -> 1): one weighted cross-sublane reduce.
        p = jnp.sum(s * w_psi, axis=0, keepdims=True)       # (1, HWp)

        # InstanceNorm of the single psi channel + sigmoid gate.
        psi = jax.nn.sigmoid(inorm(p))                      # (1, HWp)

        # Gate: broadcast psi over channels, lane-dense store.
        out_ref[n] = (ori * psi).astype(out_ref.dtype)


def gate_attention(up_x, ori_x, params):
    """up_x: (N, Cup, H, W), ori_x: (N, Cori, H, W) in NCHW (PyTorch layout)."""
    N, Cup, H, W = up_x.shape
    _, Cori, _, _ = ori_x.shape
    HW = H * W
    mid = params["w_up"].shape[1]

    # NCHW -> (N, C, HW): pure reshape (no transpose).  Pad HW to a lane-dense
    # multiple of 128; InstanceNorm stats inside the kernel mask the padding.
    HWp = -(-HW // 128) * 128
    masked = HWp != HW
    up_f = up_x.reshape(N, Cup, HW)
    ori_f = ori_x.reshape(N, Cori, HW)
    if masked:
        pad = ((0, 0), (0, 0), (0, HWp - HW))
        up_f = jnp.pad(up_f, pad)
        ori_f = jnp.pad(ori_f, pad)

    # Tiny 1x1 conv weights as (mid, Cin) VMEM tiles; biases dropped (cancelled
    # exactly by InstanceNorm(affine=False)).
    w_up = params["w_up"].T.astype(jnp.float32)    # (mid, Cup)
    w_ori = params["w_ori"].T.astype(jnp.float32)  # (mid, Cori)
    w_psi = params["w_psi"].astype(jnp.float32)    # (mid, 1)

    # Pack several batch elements per grid step so per-step DMAs are not tiny
    # (per-step overhead dominates at small HW).  Capped to keep unroll small.
    itemsize = jnp.dtype(up_x.dtype).itemsize
    per_sample_bytes = (Cup + 2 * Cori) * HWp * itemsize
    nb = int(min(N, 8, max(1, (1 << 20) // max(per_sample_bytes, 1))))
    while N % nb:
        nb -= 1

    # Explicit VMEM budget: double-buffered blocks + (mid, HWp) intermediates,
    # kept well under v7x's 64 MiB per-core VMEM.
    block_bytes = nb * (Cup + 2 * Cori) * HWp * itemsize
    vmem_limit = int(min(max(3 * block_bytes + 8 * mid * HWp * 4 + (2 << 20),
                             32 << 20), 56 << 20))

    kernel = functools.partial(_gate_attention_kernel, hw_valid=HW, masked=masked)

    out_f = pl.pallas_call(
        kernel,
        out_shape=jax.ShapeDtypeStruct((N, Cori, HWp), ori_x.dtype),
        grid_spec=pltpu.PrefetchScalarGridSpec(
            num_scalar_prefetch=0,
            grid=(N // nb,),
            in_specs=[
                pl.BlockSpec((nb, Cup, HWp), lambda i: (i, 0, 0)),
                pl.BlockSpec((nb, Cori, HWp), lambda i: (i, 0, 0)),
                pl.BlockSpec((mid, Cup), lambda i: (0, 0)),
                pl.BlockSpec((mid, Cori), lambda i: (0, 0)),
                pl.BlockSpec((mid, 1), lambda i: (0, 0)),
            ],
            out_specs=pl.BlockSpec((nb, Cori, HWp), lambda i: (i, 0, 0)),
        ),
        input_output_aliases={1: 0},  # out aliases ori (same shape/dtype/blocking)
        compiler_params=pltpu.CompilerParams(
            dimension_semantics=("parallel",),
            vmem_limit_bytes=vmem_limit,
        ),
    )(up_f, ori_f, w_up, w_ori, w_psi)

    if masked:
        out_f = out_f[..., :HW]
    return out_f.reshape(N, Cori, H, W)


def reference(up_x, ori_x, params):
    """Pure-JAX reference matching the PyTorch forward (NCHW, biases included)."""
    def conv1x1(x, w, b):  # x: (N,Cin,H,W), w: (Cin,Cout), b: (1,Cout)
        y = jnp.einsum("nchw,cm->nmhw", x, w)
        return y + b.reshape(1, -1, 1, 1)

    def inorm(x):  # per (N, C) over spatial, biased variance
        mean = jnp.mean(x, axis=(2, 3), keepdims=True)
        var = jnp.mean((x - mean) ** 2, axis=(2, 3), keepdims=True)
        return (x - mean) / jnp.sqrt(var + EPS)

    w_up = inorm(conv1x1(up_x, params["w_up"], params["b_up"]))
    w_ori = inorm(conv1x1(ori_x, params["w_ori"], params["b_ori"]))
    s = jnp.maximum(w_up + w_ori, 0.0)
    psi = jax.nn.sigmoid(inorm(conv1x1(s, params["w_psi"], params["b_psi"])))
    return ori_x * psi


if __name__ == "__main__":
    # Small shapes consistent with the module: dim=2 (Conv2d path).
    N, Cup, Cori, mid, H, W = 2, 4, 4, 8, 16, 16

    key = jax.random.PRNGKey(0)
    k = jax.random.split(key, 8)
    up_x = jax.random.normal(k[0], (N, Cup, H, W), jnp.float32)
    ori_x = jax.random.normal(k[1], (N, Cori, H, W), jnp.float32)

    # Deterministic synthetic parameters (1x1 conv weights stored as (Cin, Cout)).
    params = {
        "w_up":  0.3 * jax.random.normal(k[2], (Cup, mid), jnp.float32),
        "b_up":  0.1 * jax.random.normal(k[3], (1, mid), jnp.float32),
        "w_ori": 0.3 * jax.random.normal(k[4], (Cori, mid), jnp.float32),
        "b_ori": 0.1 * jax.random.normal(k[5], (1, mid), jnp.float32),
        "w_psi": 0.3 * jax.random.normal(k[6], (mid, 1), jnp.float32),
        "b_psi": 0.1 * jax.random.normal(k[7], (1, 1), jnp.float32),
    }

    out = gate_attention(up_x, ori_x, params)
    jax.block_until_ready(out)

    ref = reference(up_x, ori_x, params)
    assert out.shape == ori_x.shape
    assert jnp.allclose(out, ref, atol=1e-4, rtol=1e-4), "mismatch vs reference"

    print("KERNEL_OK")
</pallas_src>

<mosaic_0001>
module attributes {stable_mosaic.version = 11 : i64} {
  func.func @_gate_attention_kernel(%arg0: i32, %arg1: memref<2x4x256xf32, #tpu.memory_space<vmem>>, %arg2: memref<2x4x256xf32, #tpu.memory_space<vmem>>, %arg3: memref<8x4xf32, #tpu.memory_space<vmem>>, %arg4: memref<8x4xf32, #tpu.memory_space<vmem>>, %arg5: memref<8x1xf32, #tpu.memory_space<vmem>>, %arg6: memref<2x4x256xf32, #tpu.memory_space<vmem>>) attributes {dimension_semantics = [#tpu.dimension_semantics<parallel>], iteration_bounds = array<i64: 1>, scalar_prefetch = 0 : i64, scratch_operands = 0 : i64, tpu.core_type = #tpu.core_type<tc>, window_params = [{transform_indices = @transform_0, window_bounds = array<i64: 2, 4, 256>}, {transform_indices = @transform_1, window_bounds = array<i64: 2, 4, 256>}, {pipeline_mode = #tpu.pipeline_mode<synchronous>, transform_indices = @transform_2, window_bounds = array<i64: 8, 4>}, {pipeline_mode = #tpu.pipeline_mode<synchronous>, transform_indices = @transform_3, window_bounds = array<i64: 8, 4>}, {pipeline_mode = #tpu.pipeline_mode<synchronous>, transform_indices = @transform_4, window_bounds = array<i64: 8, 1>}, {transform_indices = @transform_5, window_bounds = array<i64: 2, 4, 256>}]} {
    %c0 = arith.constant 0 : index
    %c0_0 = arith.constant 0 : index
    %0 = vector.load %arg3[%c0, %c0_0] : memref<8x4xf32, #tpu.memory_space<vmem>>, vector<8x4xf32>
    %c0_1 = arith.constant 0 : index
    %c0_2 = arith.constant 0 : index
    %1 = vector.load %arg4[%c0_1, %c0_2] : memref<8x4xf32, #tpu.memory_space<vmem>>, vector<8x4xf32>
    %c0_3 = arith.constant 0 : index
    %c0_4 = arith.constant 0 : index
    %2 = vector.load %arg5[%c0_3, %c0_4] : memref<8x1xf32, #tpu.memory_space<vmem>>, vector<8x1xf32>
    %c0_5 = arith.constant 0 : index
    %c0_6 = arith.constant 0 : index
    %c0_7 = arith.constant 0 : index
    %3 = vector.load %arg1[%c0_5, %c0_6, %c0_7] : memref<2x4x256xf32, #tpu.memory_space<vmem>>, vector<1x4x256xf32>
    %4 = vector.shape_cast %3 : vector<1x4x256xf32> to vector<4x256xf32>
    %c0_8 = arith.constant 0 : index
    %c0_9 = arith.constant 0 : index
    %c0_10 = arith.constant 0 : index
    %5 = vector.load %arg2[%c0_8, %c0_9, %c0_10] : memref<2x4x256xf32, #tpu.memory_space<vmem>>, vector<1x4x256xf32>
    %6 = vector.shape_cast %5 : vector<1x4x256xf32> to vector<4x256xf32>
    %7 = vector.extract_strided_slice %4 {offsets = [0, 0], sizes = [1, 256], strides = [1, 1]} : vector<4x256xf32> to vector<1x256xf32>
    %8 = vector.extract_strided_slice %0 {offsets = [0, 0], sizes = [8, 1], strides = [1, 1]} : vector<8x4xf32> to vector<8x1xf32>
    %9 = vector.broadcast %7 : vector<1x256xf32> to vector<8x256xf32>
    %10 = vector.broadcast %8 : vector<8x1xf32> to vector<8x256xf32>
    %11 = arith.mulf %9, %10 : vector<8x256xf32>
    %12 = vector.extract_strided_slice %4 {offsets = [1, 0], sizes = [1, 256], strides = [1, 1]} : vector<4x256xf32> to vector<1x256xf32>
    %13 = vector.extract_strided_slice %0 {offsets = [0, 1], sizes = [8, 1], strides = [1, 1]} : vector<8x4xf32> to vector<8x1xf32>
    %14 = vector.broadcast %12 : vector<1x256xf32> to vector<8x256xf32>
    %15 = vector.broadcast %13 : vector<8x1xf32> to vector<8x256xf32>
    %16 = arith.mulf %14, %15 : vector<8x256xf32>
    %17 = arith.addf %11, %16 : vector<8x256xf32>
    %18 = vector.extract_strided_slice %4 {offsets = [2, 0], sizes = [1, 256], strides = [1, 1]} : vector<4x256xf32> to vector<1x256xf32>
    %19 = vector.extract_strided_slice %0 {offsets = [0, 2], sizes = [8, 1], strides = [1, 1]} : vector<8x4xf32> to vector<8x1xf32>
    %20 = vector.broadcast %18 : vector<1x256xf32> to vector<8x256xf32>
    %21 = vector.broadcast %19 : vector<8x1xf32> to vector<8x256xf32>
    %22 = arith.mulf %20, %21 : vector<8x256xf32>
    %23 = arith.addf %17, %22 : vector<8x256xf32>
    %24 = vector.extract_strided_slice %4 {offsets = [3, 0], sizes = [1, 256], strides = [1, 1]} : vector<4x256xf32> to vector<1x256xf32>
    %25 = vector.extract_strided_slice %0 {offsets = [0, 3], sizes = [8, 1], strides = [1, 1]} : vector<8x4xf32> to vector<8x1xf32>
    %26 = vector.broadcast %24 : vector<1x256xf32> to vector<8x256xf32>
    %27 = vector.broadcast %25 : vector<8x1xf32> to vector<8x256xf32>
    %28 = arith.mulf %26, %27 : vector<8x256xf32>
    %29 = arith.addf %23, %28 : vector<8x256xf32>
    %30 = vector.extract_strided_slice %6 {offsets = [0, 0], sizes = [1, 256], strides = [1, 1]} : vector<4x256xf32> to vector<1x256xf32>
    %31 = vector.extract_strided_slice %1 {offsets = [0, 0], sizes = [8, 1], strides = [1, 1]} : vector<8x4xf32> to vector<8x1xf32>
    %32 = vector.broadcast %30 : vector<1x256xf32> to vector<8x256xf32>
    %33 = vector.broadcast %31 : vector<8x1xf32> to vector<8x256xf32>
    %34 = arith.mulf %32, %33 : vector<8x256xf32>
    %35 = vector.extract_strided_slice %6 {offsets = [1, 0], sizes = [1, 256], strides = [1, 1]} : vector<4x256xf32> to vector<1x256xf32>
    %36 = vector.extract_strided_slice %1 {offsets = [0, 1], sizes = [8, 1], strides = [1, 1]} : vector<8x4xf32> to vector<8x1xf32>
    %37 = vector.broadcast %35 : vector<1x256xf32> to vector<8x256xf32>
    %38 = vector.broadcast %36 : vector<8x1xf32> to vector<8x256xf32>
    %39 = arith.mulf %37, %38 : vector<8x256xf32>
    %40 = arith.addf %34, %39 : vector<8x256xf32>
    %41 = vector.extract_strided_slice %6 {offsets = [2, 0], sizes = [1, 256], strides = [1, 1]} : vector<4x256xf32> to vector<1x256xf32>
    %42 = vector.extract_strided_slice %1 {offsets = [0, 2], sizes = [8, 1], strides = [1, 1]} : vector<8x4xf32> to vector<8x1xf32>
    %43 = vector.broadcast %41 : vector<1x256xf32> to vector<8x256xf32>
    %44 = vector.broadcast %42 : vector<8x1xf32> to vector<8x256xf32>
    %45 = arith.mulf %43, %44 : vector<8x256xf32>
    %46 = arith.addf %40, %45 : vector<8x256xf32>
    %47 = vector.extract_strided_slice %6 {offsets = [3, 0], sizes = [1, 256], strides = [1, 1]} : vector<4x256xf32> to vector<1x256xf32>
    %48 = vector.extract_strided_slice %1 {offsets = [0, 3], sizes = [8, 1], strides = [1, 1]} : vector<8x4xf32> to vector<8x1xf32>
    %49 = vector.broadcast %47 : vector<1x256xf32> to vector<8x256xf32>
    %50 = vector.broadcast %48 : vector<8x1xf32> to vector<8x256xf32>
    %51 = arith.mulf %49, %50 : vector<8x256xf32>
    %52 = arith.addf %46, %51 : vector<8x256xf32>
    %cst = arith.constant dense<0.000000e+00> : vector<8xf32>
    %53 = vector.multi_reduction <add>, %29, %cst [1] : vector<8x256xf32> to vector<8xf32>
    %54 = vector.shape_cast %53 : vector<8xf32> to vector<8x1xf32>
    %cst_11 = arith.constant 3.906250e-03 : f32
    %55 = vector.broadcast %cst_11 : f32 to vector<8x1xf32>
    %56 = arith.mulf %54, %55 : vector<8x1xf32>
    %57 = vector.broadcast %56 : vector<8x1xf32> to vector<8x256xf32>
    %58 = arith.subf %29, %57 : vector<8x256xf32>
    %59 = arith.mulf %58, %58 : vector<8x256xf32>
    %cst_12 = arith.constant dense<0.000000e+00> : vector<8xf32>
    %60 = vector.multi_reduction <add>, %59, %cst_12 [1] : vector<8x256xf32> to vector<8xf32>
    %61 = vector.shape_cast %60 : vector<8xf32> to vector<8x1xf32>
    %cst_13 = arith.constant 3.906250e-03 : f32
    %62 = vector.broadcast %cst_13 : f32 to vector<8x1xf32>
    %63 = arith.mulf %61, %62 : vector<8x1xf32>
    %cst_14 = arith.constant 9.99999974E-6 : f32
    %64 = vector.broadcast %cst_14 : f32 to vector<8x1xf32>
    %65 = arith.addf %63, %64 : vector<8x1xf32>
    %66 = math.rsqrt %65 : vector<8x1xf32>
    %67 = vector.broadcast %66 : vector<8x1xf32> to vector<8x256xf32>
    %68 = arith.mulf %58, %67 : vector<8x256xf32>
    %cst_15 = arith.constant dense<0.000000e+00> : vector<8xf32>
    %69 = vector.multi_reduction <add>, %52, %cst_15 [1] : vector<8x256xf32> to vector<8xf32>
    %70 = vector.shape_cast %69 : vector<8xf32> to vector<8x1xf32>
    %cst_16 = arith.constant 3.906250e-03 : f32
    %71 = vector.broadcast %cst_16 : f32 to vector<8x1xf32>
    %72 = arith.mulf %70, %71 : vector<8x1xf32>
    %73 = vector.broadcast %72 : vector<8x1xf32> to vector<8x256xf32>
    %74 = arith.subf %52, %73 : vector<8x256xf32>
    %75 = arith.mulf %74, %74 : vector<8x256xf32>
    %cst_17 = arith.constant dense<0.000000e+00> : vector<8xf32>
    %76 = vector.multi_reduction <add>, %75, %cst_17 [1] : vector<8x256xf32> to vector<8xf32>
    %77 = vector.shape_cast %76 : vector<8xf32> to vector<8x1xf32>
    %cst_18 = arith.constant 3.906250e-03 : f32
    %78 = vector.broadcast %cst_18 : f32 to vector<8x1xf32>
    %79 = arith.mulf %77, %78 : vector<8x1xf32>
    %cst_19 = arith.constant 9.99999974E-6 : f32
    %80 = vector.broadcast %cst_19 : f32 to vector<8x1xf32>
    %81 = arith.addf %79, %80 : vector<8x1xf32>
    %82 = math.rsqrt %81 : vector<8x1xf32>
    %83 = vector.broadcast %82 : vector<8x1xf32> to vector<8x256xf32>
    %84 = arith.mulf %74, %83 : vector<8x256xf32>
    %85 = arith.addf %68, %84 : vector<8x256xf32>
    %cst_20 = arith.constant 0.000000e+00 : f32
    %86 = vector.broadcast %cst_20 : f32 to vector<8x256xf32>
    %87 = arith.maximumf %85, %86 : vector<8x256xf32>
    %88 = vector.broadcast %2 : vector<8x1xf32> to vector<8x256xf32>
    %89 = arith.mulf %87, %88 : vector<8x256xf32>
    %cst_21 = arith.constant dense<0.000000e+00> : vector<256xf32>
    %90 = vector.multi_reduction <add>, %89, %cst_21 [0] : vector<8x256xf32> to vector<256xf32>
    %91 = vector.shape_cast %90 : vector<256xf32> to vector<1x256xf32>
    %cst_22 = arith.constant dense<0.000000e+00> : vector<1xf32>
    %92 = vector.multi_reduction <add>, %91, %cst_22 [1] : vector<1x256xf32> to vector<1xf32>
    %93 = vector.shape_cast %92 : vector<1xf32> to vector<1x1xf32>
    %cst_23 = arith.constant 3.906250e-03 : f32
    %94 = vector.broadcast %cst_23 : f32 to vector<1x1xf32>
    %95 = arith.mulf %93, %94 : vector<1x1xf32>
    %96 = vector.broadcast %95 : vector<1x1xf32> to vector<1x256xf32>
    %97 = arith.subf %91, %96 : vector<1x256xf32>
    %98 = arith.mulf %97, %97 : vector<1x256xf32>
    %cst_24 = arith.constant dense<0.000000e+00> : vector<1xf32>
    %99 = vector.multi_reduction <add>, %98, %cst_24 [1] : vector<1x256xf32> to vector<1xf32>
    %100 = vector.shape_cast %99 : vector<1xf32> to vector<1x1xf32>
    %cst_25 = arith.constant 3.906250e-03 : f32
    %101 = vector.broadcast %cst_25 : f32 to vector<1x1xf32>
    %102 = arith.mulf %100, %101 : vector<1x1xf32>
    %cst_26 = arith.constant 9.99999974E-6 : f32
    %103 = vector.broadcast %cst_26 : f32 to vector<1x1xf32>
    %104 = arith.addf %102, %103 : vector<1x1xf32>
    %105 = math.rsqrt %104 : vector<1x1xf32>
    %106 = vector.broadcast %105 : vector<1x1xf32> to vector<1x256xf32>
    %107 = arith.mulf %97, %106 : vector<1x256xf32>
    %108 = arith.negf %107 : vector<1x256xf32>
    %109 = math.exp %108 : vector<1x256xf32>
    %cst_27 = arith.constant 1.000000e+00 : f32
    %110 = vector.broadcast %cst_27 : f32 to vector<1x256xf32>
    %111 = arith.addf %110, %109 : vector<1x256xf32>
    %112 = arith.divf %110, %111 : vector<1x256xf32>
    %113 = vector.broadcast %112 : vector<1x256xf32> to vector<4x256xf32>
    %114 = arith.mulf %6, %113 : vector<4x256xf32>
    %c0_28 = arith.constant 0 : index
    %c0_29 = arith.constant 0 : index
    %c0_30 = arith.constant 0 : index
    %115 = vector.load %arg6[%c0_28, %c0_29, %c0_30] : memref<2x4x256xf32, #tpu.memory_space<vmem>>, vector<1x4x256xf32>
    %116 = vector.shape_cast %115 : vector<1x4x256xf32> to vector<4x256xf32>
    %117 = vector.shape_cast %114 : vector<4x256xf32> to vector<1x4x256xf32>
    tpu.vector_store %arg6[%c0_28, %c0_29, %c0_30], %117 {strides = array<i32>} : memref<2x4x256xf32, #tpu.memory_space<vmem>>, vector<1x4x256xf32>,
    %c1 = arith.constant 1 : index
    %c0_31 = arith.constant 0 : index
    %c0_32 = arith.constant 0 : index
    %118 = vector.load %arg1[%c1, %c0_31, %c0_32] : memref<2x4x256xf32, #tpu.memory_space<vmem>>, vector<1x4x256xf32>
    %119 = vector.shape_cast %118 : vector<1x4x256xf32> to vector<4x256xf32>
    %c1_33 = arith.constant 1 : index
    %c0_34 = arith.constant 0 : index
    %c0_35 = arith.constant 0 : index
    %120 = vector.load %arg2[%c1_33, %c0_34, %c0_35] : memref<2x4x256xf32, #tpu.memory_space<vmem>>, vector<1x4x256xf32>
    %121 = vector.shape_cast %120 : vector<1x4x256xf32> to vector<4x256xf32>
    %122 = vector.extract_strided_slice %119 {offsets = [0, 0], sizes = [1, 256], strides = [1, 1]} : vector<4x256xf32> to vector<1x256xf32>
    %123 = vector.extract_strided_slice %0 {offsets = [0, 0], sizes = [8, 1], strides = [1, 1]} : vector<8x4xf32> to vector<8x1xf32>
    %124 = vector.broadcast %122 : vector<1x256xf32> to vector<8x256xf32>
    %125 = vector.broadcast %123 : vector<8x1xf32> to vector<8x256xf32>
    %126 = arith.mulf %124, %125 : vector<8x256xf32>
    %127 = vector.extract_strided_slice %119 {offsets = [1, 0], sizes = [1, 256], strides = [1, 1]} : vector<4x256xf32> to vector<1x256xf32>
    %128 = vector.extract_strided_slice %0 {offsets = [0, 1], sizes = [8, 1], strides = [1, 1]} : vector<8x4xf32> to vector<8x1xf32>
    %129 = vector.broadcast %127 : vector<1x256xf32> to vector<8x256xf32>
    %130 = vector.broadcast %128 : vector<8x1xf32> to vector<8x256xf32>
    %131 = arith.mulf %129, %130 : vector<8x256xf32>
    %132 = arith.addf %126, %131 : vector<8x256xf32>
    %133 = vector.extract_strided_slice %119 {offsets = [2, 0], sizes = [1, 256], strides = [1, 1]} : vector<4x256xf32> to vector<1x256xf32>
    %134 = vector.extract_strided_slice %0 {offsets = [0, 2], sizes = [8, 1], strides = [1, 1]} : vector<8x4xf32> to vector<8x1xf32>
    %135 = vector.broadcast %133 : vector<1x256xf32> to vector<8x256xf32>
    %136 = vector.broadcast %134 : vector<8x1xf32> to vector<8x256xf32>
    %137 = arith.mulf %135, %136 : vector<8x256xf32>
    %138 = arith.addf %132, %137 : vector<8x256xf32>
    %139 = vector.extract_strided_slice %119 {offsets = [3, 0], sizes = [1, 256], strides = [1, 1]} : vector<4x256xf32> to vector<1x256xf32>
    %140 = vector.extract_strided_slice %0 {offsets = [0, 3], sizes = [8, 1], strides = [1, 1]} : vector<8x4xf32> to vector<8x1xf32>
    %141 = vector.broadcast %139 : vector<1x256xf32> to vector<8x256xf32>
    %142 = vector.broadcast %140 : vector<8x1xf32> to vector<8x256xf32>
    %143 = arith.mulf %141, %142 : vector<8x256xf32>
    %144 = arith.addf %138, %143 : vector<8x256xf32>
    %145 = vector.extract_strided_slice %121 {offsets = [0, 0], sizes = [1, 256], strides = [1, 1]} : vector<4x256xf32> to vector<1x256xf32>
    %146 = vector.extract_strided_slice %1 {offsets = [0, 0], sizes = [8, 1], strides = [1, 1]} : vector<8x4xf32> to vector<8x1xf32>
    %147 = vector.broadcast %145 : vector<1x256xf32> to vector<8x256xf32>
    %148 = vector.broadcast %146 : vector<8x1xf32> to vector<8x256xf32>
    %149 = arith.mulf %147, %148 : vector<8x256xf32>
    %150 = vector.extract_strided_slice %121 {offsets = [1, 0], sizes = [1, 256], strides = [1, 1]} : vector<4x256xf32> to vector<1x256xf32>
    %151 = vector.extract_strided_slice %1 {offsets = [0, 1], sizes = [8, 1], strides = [1, 1]} : vector<8x4xf32> to vector<8x1xf32>
    %152 = vector.broadcast %150 : vector<1x256xf32> to vector<8x256xf32>
    %153 = vector.broadcast %151 : vector<8x1xf32> to vector<8x256xf32>
    %154 = arith.mulf %152, %153 : vector<8x256xf32>
    %155 = arith.addf %149, %154 : vector<8x256xf32>
    %156 = vector.extract_strided_slice %121 {offsets = [2, 0], sizes = [1, 256], strides = [1, 1]} : vector<4x256xf32> to vector<1x256xf32>
    %157 = vector.extract_strided_slice %1 {offsets = [0, 2], sizes = [8, 1], strides = [1, 1]} : vector<8x4xf32> to vector<8x1xf32>
    %158 = vector.broadcast %156 : vector<1x256xf32> to vector<8x256xf32>
    %159 = vector.broadcast %157 : vector<8x1xf32> to vector<8x256xf32>
    %160 = arith.mulf %158, %159 : vector<8x256xf32>
    %161 = arith.addf %155, %160 : vector<8x256xf32>
    %162 = vector.extract_strided_slice %121 {offsets = [3, 0], sizes = [1, 256], strides = [1, 1]} : vector<4x256xf32> to vector<1x256xf32>
    %163 = vector.extract_strided_slice %1 {offsets = [0, 3], sizes = [8, 1], strides = [1, 1]} : vector<8x4xf32> to vector<8x1xf32>
    %164 = vector.broadcast %162 : vector<1x256xf32> to vector<8x256xf32>
    %165 = vector.broadcast %163 : vector<8x1xf32> to vector<8x256xf32>
    %166 = arith.mulf %164, %165 : vector<8x256xf32>
    %167 = arith.addf %161, %166 : vector<8x256xf32>
    %cst_36 = arith.constant dense<0.000000e+00> : vector<8xf32>
    %168 = vector.multi_reduction <add>, %144, %cst_36 [1] : vector<8x256xf32> to vector<8xf32>
    %169 = vector.shape_cast %168 : vector<8xf32> to vector<8x1xf32>
    %cst_37 = arith.constant 3.906250e-03 : f32
    %170 = vector.broadcast %cst_37 : f32 to vector<8x1xf32>
    %171 = arith.mulf %169, %170 : vector<8x1xf32>
    %172 = vector.broadcast %171 : vector<8x1xf32> to vector<8x256xf32>
    %173 = arith.subf %144, %172 : vector<8x256xf32>
    %174 = arith.mulf %173, %173 : vector<8x256xf32>
    %cst_38 = arith.constant dense<0.000000e+00> : vector<8xf32>
    %175 = vector.multi_reduction <add>, %174, %cst_38 [1] : vector<8x256xf32> to vector<8xf32>
    %176 = vector.shape_cast %175 : vector<8xf32> to vector<8x1xf32>
    %cst_39 = arith.constant 3.906250e-03 : f32
    %177 = vector.broadcast %cst_39 : f32 to vector<8x1xf32>
    %178 = arith.mulf %176, %177 : vector<8x1xf32>
    %cst_40 = arith.constant 9.99999974E-6 : f32
    %179 = vector.broadcast %cst_40 : f32 to vector<8x1xf32>
    %180 = arith.addf %178, %179 : vector<8x1xf32>
    %181 = math.rsqrt %180 : vector<8x1xf32>
    %182 = vector.broadcast %181 : vector<8x1xf32> to vector<8x256xf32>
    %183 = arith.mulf %173, %182 : vector<8x256xf32>
    %cst_41 = arith.constant dense<0.000000e+00> : vector<8xf32>
    %184 = vector.multi_reduction <add>, %167, %cst_41 [1] : vector<8x256xf32> to vector<8xf32>
    %185 = vector.shape_cast %184 : vector<8xf32> to vector<8x1xf32>
    %cst_42 = arith.constant 3.906250e-03 : f32
    %186 = vector.broadcast %cst_42 : f32 to vector<8x1xf32>
    %187 = arith.mulf %185, %186 : vector<8x1xf32>
    %188 = vector.broadcast %187 : vector<8x1xf32> to vector<8x256xf32>
    %189 = arith.subf %167, %188 : vector<8x256xf32>
    %190 = arith.mulf %189, %189 : vector<8x256xf32>
    %cst_43 = arith.constant dense<0.000000e+00> : vector<8xf32>
    %191 = vector.multi_reduction <add>, %190, %cst_43 [1] : vector<8x256xf32> to vector<8xf32>
    %192 = vector.shape_cast %191 : vector<8xf32> to vector<8x1xf32>
    %cst_44 = arith.constant 3.906250e-03 : f32
    %193 = vector.broadcast %cst_44 : f32 to vector<8x1xf32>
    %194 = arith.mulf %192, %193 : vector<8x1xf32>
    %cst_45 = arith.constant 9.99999974E-6 : f32
    %195 = vector.broadcast %cst_45 : f32 to vector<8x1xf32>
    %196 = arith.addf %194, %195 : vector<8x1xf32>
    %197 = math.rsqrt %196 : vector<8x1xf32>
    %198 = vector.broadcast %197 : vector<8x1xf32> to vector<8x256xf32>
    %199 = arith.mulf %189, %198 : vector<8x256xf32>
    %200 = arith.addf %183, %199 : vector<8x256xf32>
    %cst_46 = arith.constant 0.000000e+00 : f32
    %201 = vector.broadcast %cst_46 : f32 to vector<8x256xf32>
    %202 = arith.maximumf %200, %201 : vector<8x256xf32>
    %203 = vector.broadcast %2 : vector<8x1xf32> to vector<8x256xf32>
    %204 = arith.mulf %202, %203 : vector<8x256xf32>
    %cst_47 = arith.constant dense<0.000000e+00> : vector<256xf32>
    %205 = vector.multi_reduction <add>, %204, %cst_47 [0] : vector<8x256xf32> to vector<256xf32>
    %206 = vector.shape_cast %205 : vector<256xf32> to vector<1x256xf32>
    %cst_48 = arith.constant dense<0.000000e+00> : vector<1xf32>
    %207 = vector.multi_reduction <add>, %206, %cst_48 [1] : vector<1x256xf32> to vector<1xf32>
    %208 = vector.shape_cast %207 : vector<1xf32> to vector<1x1xf32>
    %cst_49 = arith.constant 3.906250e-03 : f32
    %209 = vector.broadcast %cst_49 : f32 to vector<1x1xf32>
    %210 = arith.mulf %208, %209 : vector<1x1xf32>
    %211 = vector.broadcast %210 : vector<1x1xf32> to vector<1x256xf32>
    %212 = arith.subf %206, %211 : vector<1x256xf32>
    %213 = arith.mulf %212, %212 : vector<1x256xf32>
    %cst_50 = arith.constant dense<0.000000e+00> : vector<1xf32>
    %214 = vector.multi_reduction <add>, %213, %cst_50 [1] : vector<1x256xf32> to vector<1xf32>
    %215 = vector.shape_cast %214 : vector<1xf32> to vector<1x1xf32>
    %cst_51 = arith.constant 3.906250e-03 : f32
    %216 = vector.broadcast %cst_51 : f32 to vector<1x1xf32>
    %217 = arith.mulf %215, %216 : vector<1x1xf32>
    %cst_52 = arith.constant 9.99999974E-6 : f32
    %218 = vector.broadcast %cst_52 : f32 to vector<1x1xf32>
    %219 = arith.addf %217, %218 : vector<1x1xf32>
    %220 = math.rsqrt %219 : vector<1x1xf32>
    %221 = vector.broadcast %220 : vector<1x1xf32> to vector<1x256xf32>
    %222 = arith.mulf %212, %221 : vector<1x256xf32>
    %223 = arith.negf %222 : vector<1x256xf32>
    %224 = math.exp %223 : vector<1x256xf32>
    %cst_53 = arith.constant 1.000000e+00 : f32
    %225 = vector.broadcast %cst_53 : f32 to vector<1x256xf32>
    %226 = arith.addf %225, %224 : vector<1x256xf32>
    %227 = arith.divf %225, %226 : vector<1x256xf32>
    %228 = vector.broadcast %227 : vector<1x256xf32> to vector<4x256xf32>
    %229 = arith.mulf %121, %228 : vector<4x256xf32>
    %c1_54 = arith.constant 1 : index
    %c0_55 = arith.constant 0 : index
    %c0_56 = arith.constant 0 : index
    %230 = vector.load %arg6[%c1_54, %c0_55, %c0_56] : memref<2x4x256xf32, #tpu.memory_space<vmem>>, vector<1x4x256xf32>
    %231 = vector.shape_cast %230 : vector<1x4x256xf32> to vector<4x256xf32>
    %232 = vector.shape_cast %229 : vector<4x256xf32> to vector<1x4x256xf32>
    tpu.vector_store %arg6[%c1_54, %c0_55, %c0_56], %232 {strides = array<i32>} : memref<2x4x256xf32, #tpu.memory_space<vmem>>, vector<1x4x256xf32>,
    return
  }
  func.func @transform_0(%arg0: i32) -> (i32, i32, i32) {
    %c0_i32 = arith.constant 0 : i32
    %c0_i32_0 = arith.constant 0 : i32
    %c0_i32_1 = arith.constant 0 : i32
    return %arg0, %c0_i32, %c0_i32_0 : i32, i32, i32
  }
  func.func @transform_1(%arg0: i32) -> (i32, i32, i32) {
    %c0_i32 = arith.constant 0 : i32
    %c0_i32_0 = arith.constant 0 : i32
    %c0_i32_1 = arith.constant 0 : i32
    return %arg0, %c0_i32, %c0_i32_0 : i32, i32, i32
  }
  func.func @transform_2(%arg0: i32) -> (i32, i32) {
    %c0_i32 = arith.constant 0 : i32
    %c0_i32_0 = arith.constant 0 : i32
    %c0_i32_1 = arith.constant 0 : i32
    return %c0_i32, %c0_i32_0 : i32, i32
  }
  func.func @transform_3(%arg0: i32) -> (i32, i32) {
    %c0_i32 = arith.constant 0 : i32
    %c0_i32_0 = arith.constant 0 : i32
    %c0_i32_1 = arith.constant 0 : i32
    return %c0_i32, %c0_i32_0 : i32, i32
  }
  func.func @transform_4(%arg0: i32) -> (i32, i32) {
    %c0_i32 = arith.constant 0 : i32
    %c0_i32_0 = arith.constant 0 : i32
    %c0_i32_1 = arith.constant 0 : i32
    return %c0_i32, %c0_i32_0 : i32, i32
  }
  func.func @transform_5(%arg0: i32) -> (i32, i32, i32) {
    %c0_i32 = arith.constant 0 : i32
    %c0_i32_0 = arith.constant 0 : i32
    %c0_i32_1 = arith.constant 0 : i32
    return %arg0, %c0_i32, %c0_i32_0 : i32, i32, i32
  }
}

</mosaic_0001>

<llo_original>
// kernel: tpu_custom_call.1
$region0: #{tpu_custom_call.1}
  #allocation0 [shape = 'u32[]', space=smem, size = 0x4, offset = 0x4, fixed_abs, tag = 'smem constant byte address 0x4 - core index']
  #allocation1 [shape = 'u32[144,128]{1,0:T(1,128)}', space=vmem, size = 0x12000, scoped, tag = 'internal scratch']
  %s0 = inlined_call_operand.vmem [shape: f32[2,4,256], index: 0, kind: input, shape index: {}]
  %s1 = inlined_call_operand.hbm [shape: f32[2,4,256], index: 1, kind: input, shape index: {}, may-alias: {1,5}]
  %s2 = inlined_call_operand.vmem [shape: f32[8,4], index: 2, kind: input, shape index: {}]
  %s3 = inlined_call_operand.vmem [shape: f32[8,4], index: 3, kind: input, shape index: {}]
  %s4 = inlined_call_operand.vmem [shape: f32[8,1], index: 4, kind: input, shape index: {}]
  %s5 = inlined_call_operand.hbm [shape: f32[2,4,256], index: 5, kind: output, shape index: {}, may-alias: {1,5}]
  %s6 = sld [smem:[#allocation0]]
  $region34: #{tpu_custom_call.1} parent=0
    _
  %s8 = ssub.s32 1, %s6
  %s9 = scalar_select 0, %s8, %s6
  $region1: #{tpu_custom_call.1} parent=0
    #allocation2 [shape = 'u8[8192]{0}', space=vmem, size = 0x2000, scoped, tag = 'input window, operand 1, single buffered']
    #allocation3 [shape = 's32[1]{0}', space=sflag, size = 0x4, scoped, tag = 'scoped memory for tpu_custom_call.1']
    #allocation4 [shape = 's32[1]{0}', space=sflag, size = 0x4, scoped, tag = 'scoped memory for tpu_custom_call.1']
    #allocation5 [shape = 'u8[8192]{0}', space=vmem, size = 0x2000, scoped, tag = 'output window, operand 0, single buffered']
    %10 = vsyncpa [#allocation3], 0
    %11 = vsyncpa [#allocation4], 0
    // Predicated region
    $region2: #{tpu_custom_call.1} parent=1 // pred_check
      _
    $region3: #{tpu_custom_call.1} parent=1 // pred_check_branch
      %13 = sbr.rel (0) target = $region5
    $region4: #{tpu_custom_call.1} parent=1 // pred_region
      _
    $region5: #{tpu_custom_call.1} parent=1 // pred_fallthru
      _
    // Predicated region
    $region6: #{tpu_custom_call.1} parent=1 // pred_check
      _
    $region7: #{tpu_custom_call.1} parent=1 // pred_check_branch
      %15 = sbr.rel (0) target = $region9
    $region8: #{tpu_custom_call.1} parent=1 // pred_region
      %s17 = ssub.s32 256, 256
      %18 = vsyncadd [#allocation3], %s17
      %s19 = sshll.u32 [#allocation2], 4
      %s20 = int_to_ptr.vmem [resolvable:$true] %s19
      %25 = dma.hbm_to_vmem [thread:$0]  %s1, 256, %s20, [#allocation3], 128, 128, 8
    $region9: #{tpu_custom_call.1} parent=1 // pred_fallthru
      _
    // Predicated region
    $region10: #{tpu_custom_call.1} parent=1 // pred_check
      _
    $region11: #{tpu_custom_call.1} parent=1 // pred_check_branch
      %27 = sbr.rel (0) target = $region13
    $region12: #{tpu_custom_call.1} parent=1 // pred_region
      _
    $region13: #{tpu_custom_call.1} parent=1 // pred_fallthru
      _
    // Predicated region
    $region14: #{tpu_custom_call.1} parent=1 // pred_check
      _
    $region15: #{tpu_custom_call.1} parent=1 // pred_check_branch
      %29 = sbr.rel (0) target = $region17
    $region16: #{tpu_custom_call.1} parent=1 // pred_region
      _
    $region17: #{tpu_custom_call.1} parent=1 // pred_fallthru
      _
    // Predicated region
    $region18: #{tpu_custom_call.1} parent=1 // pred_check
      _
    $region19: #{tpu_custom_call.1} parent=1 // pred_check_branch
      %31 = sbr.rel (0) target = $region21
    $region20: #{tpu_custom_call.1} parent=1 // pred_region
      _
    $region21: #{tpu_custom_call.1} parent=1 // pred_fallthru
      _
    // Predicated region
    $region22: #{tpu_custom_call.1} parent=1 // pred_check
      _
    $region23: #{tpu_custom_call.1} parent=1 // pred_check_branch
      %33 = sbr.rel (0) target = $region25
    $region24: #{tpu_custom_call.1} parent=1 // pred_region
      %34 = dma.done [#allocation3], 256
    $region25: #{tpu_custom_call.1} parent=1 // pred_fallthru
      _
    %v35 = vld [vmem:[%s2] sm:$0xff]
    %v36 = vld [vmem:[%s3] sm:$0xff]
    %v37 = vld [vmem:[%s4] sm:$0xff]
    %v38 = vld [vmem:[%s0] sm:$0xff]
    %v39 = vld [vmem:[#allocation2] sm:$0xff]
    %v41 = vlaneseq
    %v42 = vshrl.u32 %v41, 7
    %v43 = vsub.s32 0, %v42
    %v44 = vrot.slane %v38, %v43
    %v45 = vlaneseq
    %v46 = vshrl.u32 %v45, 7
    %v47 = vsub.s32 4, %v46
    %v48 = vrot.slane %v38, %v47
    %v51 = vlaneseq
    %v52 = vshrl.u32 %v51, 7
    %v53 = vsub.s32 0, %v52
    %v54 = vrot.slane %v44, %v53
    %v55 = vlaneseq
    %v56 = vshrl.u32 %v55, 7
    %v57 = vsub.s32 0, %v56
    %v58 = vrot.slane %v48, %v57
    %60 = vset.pattern.permute.xlu0 0
    %61 = vperm.xlu0 %60, %v35
    %v62 = vpop.permute.xlu0 %61
    %v64 = vmul.f32 %v54, %v62
    %v65 = vmul.f32 %v58, %v62
    %v66 = vlaneseq
    %v67 = vshrl.u32 %v66, 7
    %v68 = vsub.s32 1, %v67
    %v69 = vrot.slane %v38, %v68
    %v70 = vlaneseq
    %v71 = vshrl.u32 %v70, 7
    %v72 = vsub.s32 5, %v71
    %v73 = vrot.slane %v38, %v72
    %v76 = vlaneseq
    %v77 = vshrl.u32 %v76, 7
    %v78 = vsub.s32 1, %v77
    %v79 = vrot.slane %v69, %v78
    %v80 = vlaneseq
    %v81 = vshrl.u32 %v80, 7
    %v82 = vsub.s32 1, %v81
    %v83 = vrot.slane %v73, %v82
    %84 = vset.pattern.permute.xlu0 1
    %85 = vperm.xlu0 %84, %v35
    %v86 = vpop.permute.xlu0 %85
    %v88 = vmul.f32 %v79, %v86
    %v89 = vmul.f32 %v83, %v86
    %v90 = vadd.f32 %v64, %v88
    %v91 = vadd.f32 %v65, %v89
    %v92 = vlaneseq
    %v93 = vshrl.u32 %v92, 7
    %v94 = vsub.s32 2, %v93
    %v95 = vrot.slane %v38, %v94
    %v96 = vlaneseq
    %v97 = vshrl.u32 %v96, 7
    %v98 = vsub.s32 6, %v97
    %v99 = vrot.slane %v38, %v98
    %v102 = vlaneseq
    %v103 = vshrl.u32 %v102, 7
    %v104 = vsub.s32 2, %v103
    %v105 = vrot.slane %v95, %v104
    %v106 = vlaneseq
    %v107 = vshrl.u32 %v106, 7
    %v108 = vsub.s32 2, %v107
    %v109 = vrot.slane %v99, %v108
    %110 = vset.pattern.permute.xlu0 2
    %111 = vperm.xlu0 %110, %v35
    %v112 = vpop.permute.xlu0 %111
    %v114 = vmul.f32 %v105, %v112
    %v115 = vmul.f32 %v109, %v112
    %v116 = vadd.f32 %v90, %v114
    %v117 = vadd.f32 %v91, %v115
    %v118 = vlaneseq
    %v119 = vshrl.u32 %v118, 7
    %v120 = vsub.s32 3, %v119
    %v121 = vrot.slane %v38, %v120
    %v122 = vlaneseq
    %v123 = vshrl.u32 %v122, 7
    %v124 = vsub.s32 7, %v123
    %v125 = vrot.slane %v38, %v124
    %v128 = vlaneseq
    %v129 = vshrl.u32 %v128, 7
    %v130 = vsub.s32 3, %v129
    %v131 = vrot.slane %v121, %v130
    %v132 = vlaneseq
    %v133 = vshrl.u32 %v132, 7
    %v134 = vsub.s32 3, %v133
    %v135 = vrot.slane %v125, %v134
    %136 = vset.pattern.permute.xlu0 3
    %137 = vperm.xlu0 %136, %v35
    %v138 = vpop.permute.xlu0 %137
    %v140 = vmul.f32 %v131, %v138
    %v141 = vmul.f32 %v135, %v138
    %v142 = vadd.f32 %v116, %v140
    %v143 = vadd.f32 %v117, %v141
    %v145 = vlaneseq
    %v146 = vshrl.u32 %v145, 7
    %v147 = vsub.s32 0, %v146
    %v148 = vrot.slane %v39, %v147
    %v149 = vlaneseq
    %v150 = vshrl.u32 %v149, 7
    %v151 = vsub.s32 4, %v150
    %v152 = vrot.slane %v39, %v151
    %v155 = vlaneseq
    %v156 = vshrl.u32 %v155, 7
    %v157 = vsub.s32 0, %v156
    %v158 = vrot.slane %v148, %v157
    %v159 = vlaneseq
    %v160 = vshrl.u32 %v159, 7
    %v161 = vsub.s32 0, %v160
    %v162 = vrot.slane %v152, %v161
    %164 = vset.pattern.permute.xlu0 0
    %165 = vperm.xlu0 %164, %v36
    %v166 = vpop.permute.xlu0 %165
    %v168 = vmul.f32 %v158, %v166
    %v169 = vmul.f32 %v162, %v166
    %v170 = vlaneseq
    %v171 = vshrl.u32 %v170, 7
    %v172 = vsub.s32 1, %v171
    %v173 = vrot.slane %v39, %v172
    %v174 = vlaneseq
    %v175 = vshrl.u32 %v174, 7
    %v176 = vsub.s32 5, %v175
    %v177 = vrot.slane %v39, %v176
    %v180 = vlaneseq
    %v181 = vshrl.u32 %v180, 7
    %v182 = vsub.s32 1, %v181
    %v183 = vrot.slane %v173, %v182
    %v184 = vlaneseq
    %v185 = vshrl.u32 %v184, 7
    %v186 = vsub.s32 1, %v185
    %v187 = vrot.slane %v177, %v186
    %188 = vset.pattern.permute.xlu0 1
    %189 = vperm.xlu0 %188, %v36
    %v190 = vpop.permute.xlu0 %189
    %v192 = vmul.f32 %v183, %v190
    %v193 = vmul.f32 %v187, %v190
    %v194 = vadd.f32 %v168, %v192
    %v195 = vadd.f32 %v169, %v193
    %v196 = vlaneseq
    %v197 = vshrl.u32 %v196, 7
    %v198 = vsub.s32 2, %v197
    %v199 = vrot.slane %v39, %v198
    %v200 = vlaneseq
    %v201 = vshrl.u32 %v200, 7
    %v202 = vsub.s32 6, %v201
    %v203 = vrot.slane %v39, %v202
    %v206 = vlaneseq
    %v207 = vshrl.u32 %v206, 7
    %v208 = vsub.s32 2, %v207
    %v209 = vrot.slane %v199, %v208
    %v210 = vlaneseq
    %v211 = vshrl.u32 %v210, 7
    %v212 = vsub.s32 2, %v211
    %v213 = vrot.slane %v203, %v212
    %214 = vset.pattern.permute.xlu0 2
    %215 = vperm.xlu0 %214, %v36
    %v216 = vpop.permute.xlu0 %215
    %v218 = vmul.f32 %v209, %v216
    %v219 = vmul.f32 %v213, %v216
    %v220 = vadd.f32 %v194, %v218
    %v221 = vadd.f32 %v195, %v219
    %v222 = vlaneseq
    %v223 = vshrl.u32 %v222, 7
    %v224 = vsub.s32 3, %v223
    %v225 = vrot.slane %v39, %v224
    %v226 = vlaneseq
    %v227 = vshrl.u32 %v226, 7
    %v228 = vsub.s32 7, %v227
    %v229 = vrot.slane %v39, %v228
    %v232 = vlaneseq
    %v233 = vshrl.u32 %v232, 7
    %v234 = vsub.s32 3, %v233
    %v235 = vrot.slane %v225, %v234
    %v236 = vlaneseq
    %v237 = vshrl.u32 %v236, 7
    %v238 = vsub.s32 3, %v237
    %v239 = vrot.slane %v229, %v238
    %240 = vset.pattern.permute.xlu0 3
    %241 = vperm.xlu0 %240, %v36
    %v242 = vpop.permute.xlu0 %241
    %v244 = vmul.f32 %v235, %v242
    %v245 = vmul.f32 %v239, %v242
    %v246 = vadd.f32 %v220, %v244
    %v247 = vadd.f32 %v221, %v245
    %v248 = vadd.f32 %v142, %v143
    %249 = vadd.xlane.f32.xlu0 %v248
    %v250 = vpop.xlane.xlu0 %249
    %v251 = vmul.f32 %v250, 0.00390625
    %v252 = vsub.f32 %v142, %v251
    %v253 = vsub.f32 %v143, %v251
    %v254 = vmul.f32 %v252, %v252
    %v255 = vmul.f32 %v253, %v253
    %v256 = vadd.f32 %v254, %v255
    %257 = vadd.xlane.f32.xlu0 %v256
    %v258 = vpop.xlane.xlu0 %257
    %v259 = vmul.f32 %v258, 0.00390625
    %v260 = vadd.f32 %v259, 1e-05
    %v261 = vrsqrt.pop %v260
    %v262 = vmul.f32 %v252, %v261
    %v263 = vmul.f32 %v253, %v261
    %v264 = vadd.f32 %v246, %v247
    %265 = vadd.xlane.f32.xlu0 %v264
    %v266 = vpop.xlane.xlu0 %265
    %v267 = vmul.f32 %v266, 0.00390625
    %v268 = vsub.f32 %v246, %v267
    %v269 = vsub.f32 %v247, %v267
    %v270 = vmul.f32 %v268, %v268
    %v271 = vmul.f32 %v269, %v269
    %v272 = vadd.f32 %v270, %v271
    %273 = vadd.xlane.f32.xlu0 %v272
    %v274 = vpop.xlane.xlu0 %273
    %v275 = vmul.f32 %v274, 0.00390625
    %v276 = vadd.f32 %v275, 1e-05
    %v277 = vrsqrt.pop %v276
    %v278 = vmul.f32 %v268, %v277
    %v279 = vmul.f32 %v269, %v277
    %v280 = vadd.f32 %v262, %v278
    %v281 = vadd.f32 %v263, %v279
    %v282 = vmax.f32 %v280, 0.0
    %v283 = vmax.f32 %v281, 0.0
    %285 = vset.pattern.permute.xlu0 0
    %286 = vperm.xlu0 %285, %v37
    %v287 = vpop.permute.xlu0 %286
    %v289 = vmul.f32 %v282, %v287
    %v290 = vmul.f32 %v283, %v287
    %v291 = vrot.slane %v289, 4
    %v292 = vadd.f32 %v289, %v291
    %v293 = vrot.slane %v292, 2
    %v294 = vadd.f32 %v292, %v293
    %v295 = vrot.slane %v294, 1
    %v296 = vadd.f32 %v294, %v295
    %v297 = vrot.slane %v290, 4
    %v298 = vadd.f32 %v290, %v297
    %v299 = vrot.slane %v298, 2
    %v300 = vadd.f32 %v298, %v299
    %v301 = vrot.slane %v300, 1
    %v302 = vadd.f32 %v300, %v301
    %v303 = vadd.f32 %v296, %v302
    %304 = vadd.xlane.f32.xlu0 %v303
    %v305 = vpop.xlane.xlu0 %304
    %v306 = vmul.f32 %v305, 0.00390625
    %v307 = vsub.f32 %v296, %v306
    %v308 = vsub.f32 %v302, %v306
    %v309 = vmul.f32 %v307, %v307
    %v310 = vmul.f32 %v308, %v308
    %v311 = vadd.f32 %v309, %v310
    %312 = vadd.xlane.f32.xlu0 %v311
    %v313 = vpop.xlane.xlu0 %312
    %v314 = vmul.f32 %v313, 0.00390625
    %v315 = vadd.f32 %v314, 1e-05
    %v316 = vrsqrt.pop %v315
    %v317 = vmul.f32 %v307, %v316
    %v318 = vmul.f32 %v308, %v316
    %v319 = vxor.u32 %v317, 2147483648
    %v320 = vxor.u32 %v318, 2147483648
    %v321 = vmul.f32 %v319, 1.442695
    %v322 = vpow.pop %v321
    %v323 = vmul.f32 %v320, 1.442695
    %v324 = vpow.pop %v323
    %v325 = vadd.f32 %v322, 1.0
    %v326 = vadd.f32 %v324, 1.0
    %v327 = vrcp.pop %v325
    %v328 = vmul.f32 1.0, %v327
    %v329 = vrcp.pop %v326
    %v330 = vmul.f32 1.0, %v329
    %v333 = vcombine.low %v328, %v330
    %v335 = vmul.f32 %v39, %v333
    %336 = vst [vmem:[#allocation5] sm:$0xff] %v335
    %s337 = scalar_lea.vmem %s0, 8
    %v338 = vld [vmem:[%s337] sm:$0xff]
    %s339 = scalar_lea.vmem [#allocation2], 8
    %v340 = vld [vmem:[%s339] sm:$0xff]
    %v342 = vlaneseq
    %v343 = vshrl.u32 %v342, 7
    %v344 = vsub.s32 0, %v343
    %v345 = vrot.slane %v338, %v344
    %v346 = vlaneseq
    %v347 = vshrl.u32 %v346, 7
    %v348 = vsub.s32 4, %v347
    %v349 = vrot.slane %v338, %v348
    %v352 = vlaneseq
    %v353 = vshrl.u32 %v352, 7
    %v354 = vsub.s32 0, %v353
    %v355 = vrot.slane %v345, %v354
    %v356 = vlaneseq
    %v357 = vshrl.u32 %v356, 7
    %v358 = vsub.s32 0, %v357
    %v359 = vrot.slane %v349, %v358
    %v360 = vmul.f32 %v355, %v62
    %v361 = vmul.f32 %v359, %v62
    %v362 = vlaneseq
    %v363 = vshrl.u32 %v362, 7
    %v364 = vsub.s32 1, %v363
    %v365 = vrot.slane %v338, %v364
    %v366 = vlaneseq
    %v367 = vshrl.u32 %v366, 7
    %v368 = vsub.s32 5, %v367
    %v369 = vrot.slane %v338, %v368
    %v372 = vlaneseq
    %v373 = vshrl.u32 %v372, 7
    %v374 = vsub.s32 1, %v373
    %v375 = vrot.slane %v365, %v374
    %v376 = vlaneseq
    %v377 = vshrl.u32 %v376, 7
    %v378 = vsub.s32 1, %v377
    %v379 = vrot.slane %v369, %v378
    %v380 = vmul.f32 %v375, %v86
    %v381 = vmul.f32 %v379, %v86
    %v382 = vadd.f32 %v360, %v380
    %v383 = vadd.f32 %v361, %v381
    %v384 = vlaneseq
    %v385 = vshrl.u32 %v384, 7
    %v386 = vsub.s32 2, %v385
    %v387 = vrot.slane %v338, %v386
    %v388 = vlaneseq
    %v389 = vshrl.u32 %v388, 7
    %v390 = vsub.s32 6, %v389
    %v391 = vrot.slane %v338, %v390
    %v394 = vlaneseq
    %v395 = vshrl.u32 %v394, 7
    %v396 = vsub.s32 2, %v395
    %v397 = vrot.slane %v387, %v396
    %v398 = vlaneseq
    %v399 = vshrl.u32 %v398, 7
    %v400 = vsub.s32 2, %v399
    %v401 = vrot.slane %v391, %v400
    %v402 = vmul.f32 %v397, %v112
    %v403 = vmul.f32 %v401, %v112
    %v404 = vadd.f32 %v382, %v402
    %v405 = vadd.f32 %v383, %v403
    %v406 = vlaneseq
    %v407 = vshrl.u32 %v406, 7
    %v408 = vsub.s32 3, %v407
    %v409 = vrot.slane %v338, %v408
    %v410 = vlaneseq
    %v411 = vshrl.u32 %v410, 7
    %v412 = vsub.s32 7, %v411
    %v413 = vrot.slane %v338, %v412
    %v416 = vlaneseq
    %v417 = vshrl.u32 %v416, 7
    %v418 = vsub.s32 3, %v417
    %v419 = vrot.slane %v409, %v418
    %v420 = vlaneseq
    %v421 = vshrl.u32 %v420, 7
    %v422 = vsub.s32 3, %v421
    %v423 = vrot.slane %v413, %v422
    %v424 = vmul.f32 %v419, %v138
    %v425 = vmul.f32 %v423, %v138
    %v426 = vadd.f32 %v404, %v424
    %v427 = vadd.f32 %v405, %v425
    %v429 = vlaneseq
    %v430 = vshrl.u32 %v429, 7
    %v431 = vsub.s32 0, %v430
    %v432 = vrot.slane %v340, %v431
    %v433 = vlaneseq
    %v434 = vshrl.u32 %v433, 7
    %v435 = vsub.s32 4, %v434
    %v436 = vrot.slane %v340, %v435
    %v439 = vlaneseq
    %v440 = vshrl.u32 %v439, 7
    %v441 = vsub.s32 0, %v440
    %v442 = vrot.slane %v432, %v441
    %v443 = vlaneseq
    %v444 = vshrl.u32 %v443, 7
    %v445 = vsub.s32 0, %v444
    %v446 = vrot.slane %v436, %v445
    %v447 = vmul.f32 %v442, %v166
    %v448 = vmul.f32 %v446, %v166
    %v449 = vlaneseq
    %v450 = vshrl.u32 %v449, 7
    %v451 = vsub.s32 1, %v450
    %v452 = vrot.slane %v340, %v451
    %v453 = vlaneseq
    %v454 = vshrl.u32 %v453, 7
    %v455 = vsub.s32 5, %v454
    %v456 = vrot.slane %v340, %v455
    %v459 = vlaneseq
    %v460 = vshrl.u32 %v459, 7
    %v461 = vsub.s32 1, %v460
    %v462 = vrot.slane %v452, %v461
    %v463 = vlaneseq
    %v464 = vshrl.u32 %v463, 7
    %v465 = vsub.s32 1, %v464
    %v466 = vrot.slane %v456, %v465
    %v467 = vmul.f32 %v462, %v190
    %v468 = vmul.f32 %v466, %v190
    %v469 = vadd.f32 %v447, %v467
    %v470 = vadd.f32 %v448, %v468
    %v471 = vlaneseq
    %v472 = vshrl.u32 %v471, 7
    %v473 = vsub.s32 2, %v472
    %v474 = vrot.slane %v340, %v473
    %v475 = vlaneseq
    %v476 = vshrl.u32 %v475, 7
    %v477 = vsub.s32 6, %v476
    %v478 = vrot.slane %v340, %v477
    %v481 = vlaneseq
    %v482 = vshrl.u32 %v481, 7
    %v483 = vsub.s32 2, %v482
    %v484 = vrot.slane %v474, %v483
    %v485 = vlaneseq
    %v486 = vshrl.u32 %v485, 7
    %v487 = vsub.s32 2, %v486
    %v488 = vrot.slane %v478, %v487
    %v489 = vmul.f32 %v484, %v216
    %v490 = vmul.f32 %v488, %v216
    %v491 = vadd.f32 %v469, %v489
    %v492 = vadd.f32 %v470, %v490
    %v493 = vlaneseq
    %v494 = vshrl.u32 %v493, 7
    %v495 = vsub.s32 3, %v494
    %v496 = vrot.slane %v340, %v495
    %v497 = vlaneseq
    %v498 = vshrl.u32 %v497, 7
    %v499 = vsub.s32 7, %v498
    %v500 = vrot.slane %v340, %v499
    %v503 = vlaneseq
    %v504 = vshrl.u32 %v503, 7
    %v505 = vsub.s32 3, %v504
    %v506 = vrot.slane %v496, %v505
    %v507 = vlaneseq
    %v508 = vshrl.u32 %v507, 7
    %v509 = vsub.s32 3, %v508
    %v510 = vrot.slane %v500, %v509
    %v511 = vmul.f32 %v506, %v242
    %v512 = vmul.f32 %v510, %v242
    %v513 = vadd.f32 %v491, %v511
    %v514 = vadd.f32 %v492, %v512
    %v515 = vadd.f32 %v426, %v427
    %516 = vadd.xlane.f32.xlu0 %v515
    %v517 = vpop.xlane.xlu0 %516
    %v518 = vmul.f32 %v517, 0.00390625
    %v519 = vsub.f32 %v426, %v518
    %v520 = vsub.f32 %v427, %v518
    %v521 = vmul.f32 %v519, %v519
    %v522 = vmul.f32 %v520, %v520
    %v523 = vadd.f32 %v521, %v522
    %524 = vadd.xlane.f32.xlu0 %v523
    %v525 = vpop.xlane.xlu0 %524
    %v526 = vmul.f32 %v525, 0.00390625
    %v527 = vadd.f32 %v526, 1e-05
    %v528 = vrsqrt.pop %v527
    %v529 = vmul.f32 %v519, %v528
    %v530 = vmul.f32 %v520, %v528
    %v531 = vadd.f32 %v513, %v514
    %532 = vadd.xlane.f32.xlu0 %v531
    %v533 = vpop.xlane.xlu0 %532
    %v534 = vmul.f32 %v533, 0.00390625
    %v535 = vsub.f32 %v513, %v534
    %v536 = vsub.f32 %v514, %v534
    %v537 = vmul.f32 %v535, %v535
    %v538 = vmul.f32 %v536, %v536
    %v539 = vadd.f32 %v537, %v538
    %540 = vadd.xlane.f32.xlu0 %v539
    %v541 = vpop.xlane.xlu0 %540
    %v542 = vmul.f32 %v541, 0.00390625
    %v543 = vadd.f32 %v542, 1e-05
    %v544 = vrsqrt.pop %v543
    %v545 = vmul.f32 %v535, %v544
    %v546 = vmul.f32 %v536, %v544
    %v547 = vadd.f32 %v529, %v545
    %v548 = vadd.f32 %v530, %v546
    %v549 = vmax.f32 %v547, 0.0
    %v550 = vmax.f32 %v548, 0.0
    %v551 = vmul.f32 %v549, %v287
    %v552 = vmul.f32 %v550, %v287
    %v553 = vrot.slane %v551, 4
    %v554 = vadd.f32 %v551, %v553
    %v555 = vrot.slane %v554, 2
    %v556 = vadd.f32 %v554, %v555
    %v557 = vrot.slane %v556, 1
    %v558 = vadd.f32 %v556, %v557
    %v559 = vrot.slane %v552, 4
    %v560 = vadd.f32 %v552, %v559
    %v561 = vrot.slane %v560, 2
    %v562 = vadd.f32 %v560, %v561
    %v563 = vrot.slane %v562, 1
    %v564 = vadd.f32 %v562, %v563
    %v565 = vadd.f32 %v558, %v564
    %566 = vadd.xlane.f32.xlu0 %v565
    %v567 = vpop.xlane.xlu0 %566
    %v568 = vmul.f32 %v567, 0.00390625
    %v569 = vsub.f32 %v558, %v568
    %v570 = vsub.f32 %v564, %v568
    %v571 = vmul.f32 %v569, %v569
    %v572 = vmul.f32 %v570, %v570
    %v573 = vadd.f32 %v571, %v572
    %574 = vadd.xlane.f32.xlu0 %v573
    %v575 = vpop.xlane.xlu0 %574
    %v576 = vmul.f32 %v575, 0.00390625
    %v577 = vadd.f32 %v576, 1e-05
    %v578 = vrsqrt.pop %v577
    %v579 = vmul.f32 %v569, %v578
    %v580 = vmul.f32 %v570, %v578
    %v581 = vxor.u32 %v579, 2147483648
    %v582 = vxor.u32 %v580, 2147483648
    %v583 = vmul.f32 %v581, 1.442695
    %v584 = vpow.pop %v583
    %v585 = vmul.f32 %v582, 1.442695
    %v586 = vpow.pop %v585
    %v587 = vadd.f32 %v584, 1.0
    %v588 = vadd.f32 %v586, 1.0
    %v589 = vrcp.pop %v587
    %v590 = vmul.f32 1.0, %v589
    %v591 = vrcp.pop %v588
    %v592 = vmul.f32 1.0, %v591
    %v595 = vcombine.low %v590, %v592
    %v597 = vmul.f32 %v340, %v595
    %s598 = scalar_lea.vmem [#allocation5], 8
    %599 = vst [vmem:[%s598] sm:$0xff] %v597
    // Predicated region
    $region26: #{tpu_custom_call.1} parent=1 // pred_check
      _
    $region27: #{tpu_custom_call.1} parent=1 // pred_check_branch
      %601 = sbr.rel (0) target = $region29
    $region28: #{tpu_custom_call.1} parent=1 // pred_region
      %s603 = ssub.s32 256, 256
      %604 = vsyncadd [#allocation4], %s603
      %s605 = sshll.u32 [#allocation5], 4
      %s606 = int_to_ptr.vmem [resolvable:$true] %s605
      %611 = dma.vmem_to_hbm [thread:$0]  %s606, 256, %s5, [#allocation4], 128, 128, 8
    $region29: #{tpu_custom_call.1} parent=1 // pred_fallthru
      _
    // Predicated region
    $region30: #{tpu_custom_call.1} parent=1 // pred_check
      _
    $region31: #{tpu_custom_call.1} parent=1 // pred_check_branch
      %613 = sbr.rel (0) target = $region33
    $region32: #{tpu_custom_call.1} parent=1 // pred_region
      %614 = dma.done [#allocation4], 256
    $region33: #{tpu_custom_call.1} parent=1 // pred_fallthru
      _
    %615 = vsyncpa [#allocation3], 1
    %616 = vsyncpa [#allocation4], 1

</llo_original>
